<compile_context>
chip_gen: v6e
topology: v6e:2x2x1
jax: 0.10.0
libtpu: 0.0.40
codegen_flags: <defaults>
</compile_context>

<pallas_src>
import functools

import jax
import jax.numpy as jnp
from jax.experimental import pallas as pl
from jax.experimental.pallas import tpu as pltpu


# ---------------------------------------------------------------------------
# Pre-pass: projection + per-head attention logits (hoisted out of the hot
# per-dst-tile kernel, computed once per layer).
# ---------------------------------------------------------------------------
def gat_project_kernel(x_ref, w_ref, albd_ref, arbd_ref,
                       feat_ref, el_ref, er_ref):
    x = x_ref[...].astype(jnp.bfloat16)
    w = w_ref[...].astype(jnp.bfloat16)
    feat = jnp.dot(x, w, preferred_element_type=jnp.float32)          # (T, H*F)
    feat_ref[...] = feat.astype(feat_ref.dtype)                        # bf16 store
    # Block-diagonal attn matrices batch all heads into one MXU matmul each.
    el_ref[...] = jnp.dot(feat, albd_ref[...], preferred_element_type=jnp.float32)
    er_ref[...] = jnp.dot(feat, arbd_ref[...], preferred_element_type=jnp.float32)


def gat_project(x, w, al_bd, ar_bd, *, tile):
    n, fin = x.shape
    hf = w.shape[1]
    num_heads = al_bd.shape[1]
    tiled = lambda i: (i, 0)
    const = lambda i: (0, 0)
    cost = pl.CostEstimate(
        flops=2 * n * fin * hf + 4 * n * hf * num_heads,
        transcendentals=0,
        bytes_accessed=(n * fin * x.dtype.itemsize + n * hf * 2
                        + 2 * n * num_heads * 4 + fin * hf * 4),
    )
    return pl.pallas_call(
        gat_project_kernel,
        out_shape=(
            jax.ShapeDtypeStruct((n, hf), jnp.bfloat16),      # feat (bf16)
            jax.ShapeDtypeStruct((n, num_heads), jnp.float32),  # el
            jax.ShapeDtypeStruct((n, num_heads), jnp.float32),  # er
        ),
        grid=(n // tile,),
        in_specs=[
            pl.BlockSpec((tile, fin), tiled),                                  # x rows
            pl.BlockSpec((fin, hf), const, pipeline_mode=pl.Buffered(1)),      # W
            pl.BlockSpec((hf, num_heads), const, pipeline_mode=pl.Buffered(1)),  # attn_l bd
            pl.BlockSpec((hf, num_heads), const, pipeline_mode=pl.Buffered(1)),  # attn_r bd
        ],
        out_specs=(
            pl.BlockSpec((tile, hf), tiled),
            pl.BlockSpec((tile, num_heads), tiled),
            pl.BlockSpec((tile, num_heads), tiled),
        ),
        compiler_params=pltpu.CompilerParams(
            dimension_semantics=("parallel",),
            vmem_limit_bytes=64 * 1024 * 1024),
        cost_estimate=cost,
    )(x, w, al_bd, ar_bd)


# ---------------------------------------------------------------------------
# Aggregation kernel: masked edge-softmax + neighbor aggregation per dst tile.
# ---------------------------------------------------------------------------
def gat_agg_kernel(feat_ref, el_ref, er_ref, bias_ref, adj_ref, out_ref, *,
                   num_heads, out_feats, apply_elu):
    feat = feat_ref[...]                                   # (N, H*F) bf16
    el = el_ref[...]                                       # (H, N)   f32
    er = er_ref[...]                                       # (T, H)   f32
    adj = adj_ref[...].astype(jnp.float32)                 # (T, N)   0/1 (from int8)
    bias = bias_ref[...]                                   # (1, H*F) f32

    head_outs = []
    for h in range(num_heads):                             # H is small & static
        lo = h * out_feats
        # e[i, j] = leaky_relu(er_i + el_j, 0.2); leaky via one mul + one max.
        s = er[:, h:h + 1] + el[h:h + 1, :]                # (T, N)
        s = jnp.maximum(s, 0.2 * s)
        # Stable masked softmax: the row max over the unmasked logits cancels
        # in the ratio; a single multiplicative adj mask after exp keeps
        # isolated rows at alpha == 0 (bias-only output).
        m = jnp.max(s, axis=-1, keepdims=True)
        p = jnp.exp(s - m) * adj                           # (T, N)
        denom = jnp.sum(p, axis=-1, keepdims=True)         # (T, 1)
        # Aggregate UNNORMALIZED weights on the MXU and normalize the small
        # (T, F) result instead of scaling the (T, N) alpha matrix.
        agg = jnp.dot(p.astype(jnp.bfloat16), feat[:, lo:lo + out_feats],
                      preferred_element_type=jnp.float32)  # (T, F)
        inv = pl.reciprocal(jnp.maximum(denom, 1e-9), approx=True)
        head_outs.append(agg * inv)

    out = head_outs[0] if num_heads == 1 else jnp.concatenate(head_outs, axis=-1)
    out = out + bias                                       # (T, H*F) lane-dense
    if apply_elu:
        # ELU via clamped exp so the discarded branch never produces inf.
        out = jnp.where(out > 0, out, jnp.exp(jnp.minimum(out, 0.0)) - 1.0)
    out_ref[...] = out.astype(out_ref.dtype)


def gat_conv(feat, el_t, er, bias, adj_i8, *, num_heads, out_feats, tile,
             apply_elu, out_dtype):
    n = feat.shape[0]
    hf = num_heads * out_feats
    tiled = lambda i: (i, 0)
    const = lambda i: (0, 0)
    kernel = functools.partial(gat_agg_kernel, num_heads=num_heads,
                               out_feats=out_feats, apply_elu=apply_elu)
    cost = pl.CostEstimate(
        flops=2 * n * n * hf + 8 * num_heads * n * n,
        transcendentals=num_heads * n * n,
        bytes_accessed=(n * n                                  # adj (int8)
                        + n * hf * 2                           # feat (bf16)
                        + n * hf * jnp.dtype(out_dtype).itemsize
                        + 2 * n * num_heads * 4 + hf * 4),
    )
    return pl.pallas_call(
        kernel,
        out_shape=jax.ShapeDtypeStruct((n, hf), out_dtype),
        grid=(n // tile,),
        in_specs=[
            # Constant-index blocks are fetched once; single-buffer them.
            pl.BlockSpec((n, hf), const, pipeline_mode=pl.Buffered(1)),        # feat_src
            pl.BlockSpec((num_heads, n), const, pipeline_mode=pl.Buffered(1)),  # el (H, N)
            pl.BlockSpec((tile, num_heads), tiled),                             # er tile
            pl.BlockSpec((1, hf), const, pipeline_mode=pl.Buffered(1)),         # bias
            pl.BlockSpec((tile, n), tiled),                                     # adj rows (int8)
        ],
        out_specs=pl.BlockSpec((tile, hf), tiled),
        compiler_params=pltpu.CompilerParams(
            dimension_semantics=("parallel",),          # shard dst tiles across TCs
            vmem_limit_bytes=64 * 1024 * 1024),
        cost_estimate=cost,
    )(feat, el_t, er, bias, adj_i8)


# ---------------------------------------------------------------------------
# Model wrapper.
# ---------------------------------------------------------------------------
def _round_up(n, m):
    return ((n + m - 1) // m) * m


def _choose_tile(n):
    """Dst-row tile + padded node count.

    256 keeps 2x(tile x N) adj buffers + feat_src + output comfortably inside
    v7x's 64 MiB VMEM (with headroom for both TensorCores); v5e/v6e could go
    to 512 for large N.  N is padded so the tile divides it (padded rows/cols
    carry adj == 0 and are sliced off at the end).
    """
    tile = 256 if n >= 256 else _round_up(n, 8)
    return tile, _round_up(n, tile)


def _block_diag(attn):
    """(H, F) per-head attention vectors -> (H*F, H) block-diagonal matrix."""
    h, f = attn.shape
    eye = jnp.eye(h, dtype=attn.dtype)
    return (attn[:, :, None] * eye[:, None, :]).reshape(h * f, h)


def gat_model_forward(x, adj, params, *, num_heads, h_feats, num_classes):
    n = x.shape[0]
    tile, n_pad = _choose_tile(n)
    pad = n_pad - n
    if pad:
        x = jnp.pad(x, ((0, pad), (0, 0)))
        adj = jnp.pad(adj, ((0, pad), (0, pad)))
    adj_i8 = (adj > 0).astype(jnp.int8)        # 1 byte/elem adjacency stream

    # Layer 1: GATConv(in, h_feats, num_heads, activation=elu), flatten(1).
    feat1, el1, er1 = gat_project(x, params["W1"],
                                  _block_diag(params["al1"]),
                                  _block_diag(params["ar1"]), tile=tile)
    h = gat_conv(feat1, jnp.transpose(el1), er1, params["b1"], adj_i8,
                 num_heads=num_heads, out_feats=h_feats, tile=tile,
                 apply_elu=True, out_dtype=jnp.bfloat16)
    # h is (n_pad, num_heads*h_feats) == flatten(1); bf16 (layer 2 casts anyway).

    # Layer 2: GATConv(h_feats*heads, num_classes, 1 head, activation=None).
    feat2, el2, er2 = gat_project(h, params["W2"],
                                  _block_diag(params["al2"]),
                                  _block_diag(params["ar2"]), tile=tile)
    out = gat_conv(feat2, jnp.transpose(el2), er2, params["b2"], adj_i8,
                   num_heads=1, out_feats=num_classes, tile=tile,
                   apply_elu=False, out_dtype=jnp.float32)
    # mean over a single head is the identity.
    return out[:n]


def init_params(key, in_size, h_feats, num_heads, num_classes):
    ks = jax.random.split(key, 8)
    s = 0.3
    return {
        "W1": s * jax.random.normal(ks[0], (in_size, num_heads * h_feats), jnp.float32),
        "al1": s * jax.random.normal(ks[1], (num_heads, h_feats), jnp.float32),
        "ar1": s * jax.random.normal(ks[2], (num_heads, h_feats), jnp.float32),
        "b1": jnp.zeros((1, num_heads * h_feats), jnp.float32),
        "W2": s * jax.random.normal(ks[3], (num_heads * h_feats, num_classes), jnp.float32),
        "al2": s * jax.random.normal(ks[4], (1, num_classes), jnp.float32),
        "ar2": s * jax.random.normal(ks[5], (1, num_classes), jnp.float32),
        "b2": jnp.zeros((1, num_classes), jnp.float32),
    }


if __name__ == "__main__":
    N = 16          # number of graph nodes
    IN_SIZE = 8     # input feature dim
    H_FEATS = 8     # args.h_feats
    NUM_HEADS = 2   # args.num_heads
    NUM_CLASSES = 4

    key = jax.random.PRNGKey(0)
    k_x, k_p = jax.random.split(key)

    # Node features (N, F_in).
    x = jax.random.normal(k_x, (N, IN_SIZE), jnp.float32)

    # Graph: ring j -> (j+1) % N plus self-loops; adj[dst, src] = 1 iff edge.
    eye = jnp.eye(N, dtype=jnp.float32)
    adj = jnp.clip(eye + jnp.roll(eye, shift=1, axis=0), 0.0, 1.0)

    params = init_params(k_p, IN_SIZE, H_FEATS, NUM_HEADS, NUM_CLASSES)

    out = gat_model_forward(x, adj, params, num_heads=NUM_HEADS,
                            h_feats=H_FEATS, num_classes=NUM_CLASSES)
    out = jax.block_until_ready(out)

    assert out.shape == (N, NUM_CLASSES), out.shape
    assert bool(jnp.all(jnp.isfinite(out)))
    print("KERNEL_OK")
</pallas_src>

<mosaic_0001>
module attributes {stable_mosaic.version = 11 : i64} {
  func.func @gat_project_kernel(%arg0: i32, %arg1: memref<16x8xf32, #tpu.memory_space<vmem>>, %arg2: memref<8x16xf32, #tpu.memory_space<vmem>>, %arg3: memref<16x2xf32, #tpu.memory_space<vmem>>, %arg4: memref<16x2xf32, #tpu.memory_space<vmem>>, %arg5: memref<16x16xbf16, #tpu.memory_space<vmem>>, %arg6: memref<16x2xf32, #tpu.memory_space<vmem>>, %arg7: memref<16x2xf32, #tpu.memory_space<vmem>>) attributes {dimension_semantics = [#tpu.dimension_semantics<parallel>], iteration_bounds = array<i64: 1>, scalar_prefetch = 0 : i64, scratch_operands = 0 : i64, tpu.core_type = #tpu.core_type<tc>, window_params = [{transform_indices = @transform_0, window_bounds = array<i64: 16, 8>}, {pipeline_mode = #tpu.pipeline_mode<synchronous>, transform_indices = @transform_1, window_bounds = array<i64: 8, 16>}, {pipeline_mode = #tpu.pipeline_mode<synchronous>, transform_indices = @transform_2, window_bounds = array<i64: 16, 2>}, {pipeline_mode = #tpu.pipeline_mode<synchronous>, transform_indices = @transform_3, window_bounds = array<i64: 16, 2>}, {transform_indices = @transform_4, window_bounds = array<i64: 16, 16>}, {transform_indices = @transform_5, window_bounds = array<i64: 16, 2>}, {transform_indices = @transform_6, window_bounds = array<i64: 16, 2>}]} {
    %c0 = arith.constant 0 : index
    %c0_0 = arith.constant 0 : index
    %0 = vector.load %arg1[%c0, %c0_0] : memref<16x8xf32, #tpu.memory_space<vmem>>, vector<16x8xf32>
    %1 = arith.truncf %0 : vector<16x8xf32> to vector<16x8xbf16>
    %c0_1 = arith.constant 0 : index
    %c0_2 = arith.constant 0 : index
    %2 = vector.load %arg2[%c0_1, %c0_2] : memref<8x16xf32, #tpu.memory_space<vmem>>, vector<8x16xf32>
    %3 = arith.truncf %2 : vector<8x16xf32> to vector<8x16xbf16>
    %cst = arith.constant dense<0.000000e+00> : vector<16x16xf32>
    %4 = tpu.matmul %1, %3, %cst {dimension_numbers = #tpu.dot_dimension_numbers<[1], [0], [0], [1], [0, 0, 1, 1], [], []>} : vector<16x8xbf16>, vector<8x16xbf16>, vector<16x16xf32> -> vector<16x16xf32>
    %5 = arith.truncf %4 : vector<16x16xf32> to vector<16x16xbf16>
    %c0_3 = arith.constant 0 : index
    %c0_4 = arith.constant 0 : index
    %6 = vector.load %arg5[%c0_3, %c0_4] : memref<16x16xbf16, #tpu.memory_space<vmem>>, vector<16x16xbf16>
    tpu.vector_store %arg5[%c0_3, %c0_4], %5 {strides = array<i32>} : memref<16x16xbf16, #tpu.memory_space<vmem>>, vector<16x16xbf16>,
    %c0_5 = arith.constant 0 : index
    %c0_6 = arith.constant 0 : index
    %7 = vector.load %arg3[%c0_5, %c0_6] : memref<16x2xf32, #tpu.memory_space<vmem>>, vector<16x2xf32>
    %cst_7 = arith.constant dense<0.000000e+00> : vector<16x2xf32>
    %8 = tpu.matmul %4, %7, %cst_7 {dimension_numbers = #tpu.dot_dimension_numbers<[1], [0], [0], [1], [0, 0, 1, 1], [], []>} : vector<16x16xf32>, vector<16x2xf32>, vector<16x2xf32> -> vector<16x2xf32>
    %c0_8 = arith.constant 0 : index
    %c0_9 = arith.constant 0 : index
    %9 = vector.load %arg6[%c0_8, %c0_9] : memref<16x2xf32, #tpu.memory_space<vmem>>, vector<16x2xf32>
    tpu.vector_store %arg6[%c0_8, %c0_9], %8 {strides = array<i32>} : memref<16x2xf32, #tpu.memory_space<vmem>>, vector<16x2xf32>,
    %c0_10 = arith.constant 0 : index
    %c0_11 = arith.constant 0 : index
    %10 = vector.load %arg4[%c0_10, %c0_11] : memref<16x2xf32, #tpu.memory_space<vmem>>, vector<16x2xf32>
    %cst_12 = arith.constant dense<0.000000e+00> : vector<16x2xf32>
    %11 = tpu.matmul %4, %10, %cst_12 {dimension_numbers = #tpu.dot_dimension_numbers<[1], [0], [0], [1], [0, 0, 1, 1], [], []>} : vector<16x16xf32>, vector<16x2xf32>, vector<16x2xf32> -> vector<16x2xf32>
    %c0_13 = arith.constant 0 : index
    %c0_14 = arith.constant 0 : index
    %12 = vector.load %arg7[%c0_13, %c0_14] : memref<16x2xf32, #tpu.memory_space<vmem>>, vector<16x2xf32>
    tpu.vector_store %arg7[%c0_13, %c0_14], %11 {strides = array<i32>} : memref<16x2xf32, #tpu.memory_space<vmem>>, vector<16x2xf32>,
    return
  }
  func.func @transform_0(%arg0: i32) -> (i32, i32) {
    %c0_i32 = arith.constant 0 : i32
    %c0_i32_0 = arith.constant 0 : i32
    return %arg0, %c0_i32 : i32, i32
  }
  func.func @transform_1(%arg0: i32) -> (i32, i32) {
    %c0_i32 = arith.constant 0 : i32
    %c0_i32_0 = arith.constant 0 : i32
    %c0_i32_1 = arith.constant 0 : i32
    return %c0_i32, %c0_i32_0 : i32, i32
  }
  func.func @transform_2(%arg0: i32) -> (i32, i32) {
    %c0_i32 = arith.constant 0 : i32
    %c0_i32_0 = arith.constant 0 : i32
    %c0_i32_1 = arith.constant 0 : i32
    return %c0_i32, %c0_i32_0 : i32, i32
  }
  func.func @transform_3(%arg0: i32) -> (i32, i32) {
    %c0_i32 = arith.constant 0 : i32
    %c0_i32_0 = arith.constant 0 : i32
    %c0_i32_1 = arith.constant 0 : i32
    return %c0_i32, %c0_i32_0 : i32, i32
  }
  func.func @transform_4(%arg0: i32) -> (i32, i32) {
    %c0_i32 = arith.constant 0 : i32
    %c0_i32_0 = arith.constant 0 : i32
    return %arg0, %c0_i32 : i32, i32
  }
  func.func @transform_5(%arg0: i32) -> (i32, i32) {
    %c0_i32 = arith.constant 0 : i32
    %c0_i32_0 = arith.constant 0 : i32
    return %arg0, %c0_i32 : i32, i32
  }
  func.func @transform_6(%arg0: i32) -> (i32, i32) {
    %c0_i32 = arith.constant 0 : i32
    %c0_i32_0 = arith.constant 0 : i32
    return %arg0, %c0_i32 : i32, i32
  }
}

</mosaic_0001>

<llo_original>
// kernel: tpu_custom_call.1
$region0: #{tpu_custom_call.1}
  #allocation0 [shape = 'u32[]', space=smem, size = 0x4, offset = 0x4, fixed_abs, tag = 'smem constant byte address 0x4 - core index']
  #allocation1 [shape = 'u32[144,128]{1,0:T(1,128)}', space=vmem, size = 0x12000, scoped, tag = 'internal scratch']
  %s0 = inlined_call_operand.vmem [shape: f32[16,8], index: 0, kind: input, shape index: {}]
  %s1 = inlined_call_operand.vmem [shape: f32[8,16], index: 1, kind: input, shape index: {}]
  %s2 = inlined_call_operand.vmem [shape: f32[16,2], index: 2, kind: input, shape index: {}]
  %s3 = inlined_call_operand.vmem [shape: f32[16,2], index: 3, kind: input, shape index: {}]
  %s4 = inlined_call_operand.hbm [shape: bf16[16,16], index: 4, kind: output, shape index: {0}]
  %s5 = inlined_call_operand.vmem [shape: f32[16,2], index: 5, kind: output, shape index: {1}]
  %s6 = inlined_call_operand.vmem [shape: f32[16,2], index: 6, kind: output, shape index: {2}]
  %7 = xla_tuple %s4, %s5, %s6
  %s8 = sld [smem:[#allocation0]]
  $region42: #{tpu_custom_call.1} parent=0
    _
  %s10 = ssub.s32 1, %s8
  %s11 = scalar_select 0, %s10, %s8
  $region1: #{tpu_custom_call.1} parent=0
    #allocation2 [shape = 'u8[4096]{0}', space=vmem, size = 0x1000, scoped, tag = 'output window, operand 0, single buffered']
    #allocation3 [shape = 's32[1]{0}', space=sflag, size = 0x4, scoped, tag = 'scoped memory for tpu_custom_call.1']
    %12 = vsyncpa [#allocation3], 0
    // Predicated region
    $region2: #{tpu_custom_call.1} parent=1 // pred_check
      _
    $region3: #{tpu_custom_call.1} parent=1 // pred_check_branch
      %14 = sbr.rel (0) target = $region5
    $region4: #{tpu_custom_call.1} parent=1 // pred_region
      _
    $region5: #{tpu_custom_call.1} parent=1 // pred_fallthru
      _
    // Predicated region
    $region6: #{tpu_custom_call.1} parent=1 // pred_check
      _
    $region7: #{tpu_custom_call.1} parent=1 // pred_check_branch
      %16 = sbr.rel (0) target = $region9
    $region8: #{tpu_custom_call.1} parent=1 // pred_region
      _
    $region9: #{tpu_custom_call.1} parent=1 // pred_fallthru
      _
    // Predicated region
    $region10: #{tpu_custom_call.1} parent=1 // pred_check
      _
    $region11: #{tpu_custom_call.1} parent=1 // pred_check_branch
      %18 = sbr.rel (0) target = $region13
    $region12: #{tpu_custom_call.1} parent=1 // pred_region
      _
    $region13: #{tpu_custom_call.1} parent=1 // pred_fallthru
      _
    // Predicated region
    $region14: #{tpu_custom_call.1} parent=1 // pred_check
      _
    $region15: #{tpu_custom_call.1} parent=1 // pred_check_branch
      %20 = sbr.rel (0) target = $region17
    $region16: #{tpu_custom_call.1} parent=1 // pred_region
      _
    $region17: #{tpu_custom_call.1} parent=1 // pred_fallthru
      _
    %v22 = vld [vmem:[%s0] sm:$0xff]
    %v23 = vld [vmem:[%s0 + $0x8] sm:$0xff]
    %v24 = vpack.c.bf16 %v23, %v22
    %v25 = vld [vmem:[%s1] sm:$0xff]
    %v26 = vpack.c.bf16 %v25, %v25
    %vm27 = vcmask 64512
    %v29 = vsel %vm27, %v24, 0
    %vm31 = vcmask 1043456
    %v33 = vsel %vm31, %v26, 0
    %35 = vmatprep.subr.bf16.mxu0 0
    %36 = vmatpush1.bf16.msra.mxu0 0
    %37 = vmatprep.subr.bf16.mxu0 0
    %38 = vmatpush1.bf16.msra.mxu0 0
    %39 = vmatprep.subr.bf16.mxu0 0
    %40 = vmatpush1.bf16.msra.mxu0 0
    %41 = vmatprep.subr.bf16.mxu0 0
    %42 = vmatpush1.bf16.msra.mxu0 0
    %43 = vmatprep.subr.bf16.mxu0 0
    %44 = vmatpush1.bf16.msra.mxu0 0
    %45 = vmatprep.subr.bf16.mxu0 0
    %46 = vmatpush1.bf16.msra.mxu0 0
    %47 = vmatprep.subr.bf16.mxu0 0
    %48 = vmatpush1.bf16.msra.mxu0 0
    %49 = vmatprep.subr.bf16.mxu0 0
    %50 = vmatpush1.bf16.msra.mxu0 %v33
    %51 = vmatprep.subr.bf16.mxu0 0
    %52 = vmatpush2.bf16.msra.mxu0 0
    %53 = vmatprep.subr.bf16.mxu0 0
    %54 = vmatpush2.bf16.msra.mxu0 0
    %55 = vmatprep.subr.bf16.mxu0 0
    %56 = vmatpush2.bf16.msra.mxu0 0
    %57 = vmatprep.subr.bf16.mxu0 0
    %58 = vmatpush2.bf16.msra.mxu0 0
    %59 = vmatprep.subr.bf16.mxu0 0
    %60 = vmatpush2.bf16.msra.mxu0 0
    %61 = vmatprep.subr.bf16.mxu0 0
    %62 = vmatpush2.bf16.msra.mxu0 0
    %63 = vmatprep.subr.bf16.mxu0 0
    %64 = vmatpush2.bf16.msra.mxu0 0
    %65 = vmatprep.subr.bf16.mxu0 0
    %66 = vmatpush2.bf16.msra.mxu0 0
    %67 = vmatprep.mubr.bf16.mxu0 0
    %68 = vmatmul.mubr.bf16.gmra.mxu0 %v29
    %v69 = vpop.f32.mrf.mxu0
    %v70 = vadd.f32 0.0, %v69
    %v71 = vpop.f32.mrf.mxu0
    %v72 = vpop.f32.mrf.mxu0
    %v73 = vadd.f32 0.0, %v72
    %v74 = vpop.f32.mrf.mxu0
    %75 = vdwg.mxu0
    %v76 = vpack.c.bf16 %v73, %v70
    %v78 = vunpack.c.l.b16 %v76
    %v79 = vunpack.c.h.b16 %v76
    %v80 = vpack.c.b16 %v78, %v78
    %v81 = vpack.c.b16 %v79, %v79
    %vm84 = vcmask 125952
    %85 = vst.msk [vmem:[#allocation2] sm:$0xf] %vm84, %v80
    %86 = vst.msk [vmem:[#allocation2 + $0x4] sm:$0xf] %vm84, %v81
    %v87 = vld [vmem:[%s2] sm:$0xff]
    %v88 = vld [vmem:[%s2 + $0x8] sm:$0xff]
    %vm89 = vcmask 130048
    %v91 = vsel %vm89, %v70, 0
    %v94 = vsel %vm89, %v73, 0
    %96 = vmatprep.subr.mxu0 0.0
    %97 = vmatpush1.msra.mxu0 0.0
    %98 = vmatprep.subr.mxu0 0.0
    %99 = vmatpush1.msra.mxu0 0.0
    %100 = vmatprep.subr.mxu0 0.0
    %101 = vmatpush1.msra.mxu0 0.0
    %102 = vmatprep.subr.mxu0 0.0
    %103 = vmatpush1.msra.mxu0 0.0
    %104 = vmatprep.subr.mxu0 0.0
    %105 = vmatpush1.msra.mxu0 0.0
    %106 = vmatprep.subr.mxu0 0.0
    %107 = vmatpush1.msra.mxu0 0.0
    %108 = vmatprep.subr.mxu0 0.0
    %109 = vmatpush1.msra.mxu0 0.0
    %110 = vmatprep.subr.mxu0 0.0
    %111 = vmatpush1.msra.mxu0 0.0
    %112 = vmatprep.subr.mxu0 0.0
    %113 = vmatpush1.msra.mxu0 0.0
    %114 = vmatprep.subr.mxu0 0.0
    %115 = vmatpush1.msra.mxu0 0.0
    %116 = vmatprep.subr.mxu0 0.0
    %117 = vmatpush1.msra.mxu0 0.0
    %118 = vmatprep.subr.mxu0 0.0
    %119 = vmatpush1.msra.mxu0 0.0
    %120 = vmatprep.subr.mxu0 0.0
    %121 = vmatpush1.msra.mxu0 0.0
    %122 = vmatprep.subr.mxu0 0.0
    %123 = vmatpush1.msra.mxu0 0.0
    %124 = vmatprep.subr.mxu0 0.0
    %125 = vmatpush1.msra.mxu0 %v88
    %126 = vmatprep.subr.mxu0 0.0
    %127 = vmatpush1.msra.mxu0 %v87
    %128 = vmatprep.subr.mxu0 0.0
    %129 = vmatpush2.msra.mxu0 0.0
    %130 = vmatprep.subr.mxu0 0.0
    %131 = vmatpush2.msra.mxu0 0.0
    %132 = vmatprep.subr.mxu0 0.0
    %133 = vmatpush2.msra.mxu0 0.0
    %134 = vmatprep.subr.mxu0 0.0
    %135 = vmatpush2.msra.mxu0 0.0
    %136 = vmatprep.subr.mxu0 0.0
    %137 = vmatpush2.msra.mxu0 0.0
    %138 = vmatprep.subr.mxu0 0.0
    %139 = vmatpush2.msra.mxu0 0.0
    %140 = vmatprep.subr.mxu0 0.0
    %141 = vmatpush2.msra.mxu0 0.0
    %142 = vmatprep.subr.mxu0 0.0
    %143 = vmatpush2.msra.mxu0 0.0
    %144 = vmatprep.subr.mxu0 0.0
    %145 = vmatpush2.msra.mxu0 0.0
    %146 = vmatprep.subr.mxu0 0.0
    %147 = vmatpush2.msra.mxu0 0.0
    %148 = vmatprep.subr.mxu0 0.0
    %149 = vmatpush2.msra.mxu0 0.0
    %150 = vmatprep.subr.mxu0 0.0
    %151 = vmatpush2.msra.mxu0 0.0
    %152 = vmatprep.subr.mxu0 0.0
    %153 = vmatpush2.msra.mxu0 0.0
    %154 = vmatprep.subr.mxu0 0.0
    %155 = vmatpush2.msra.mxu0 0.0
    %156 = vmatprep.subr.mxu0 0.0
    %157 = vmatpush2.msra.mxu0 0.0
    %158 = vmatprep.subr.mxu0 0.0
    %159 = vmatpush2.msra.mxu0 0.0
    %160 = vmatprep.mubr.f32.mxu0 0.0
    %161 = vmatmul.mubr.f32.gmra.mxu0 %v91
    %v162 = vpop.f32.mrf.mxu0
    %v163 = vadd.f32 0.0, %v162
    %v164 = vpop.f32.mrf.mxu0
    %165 = vmatprep.mubr.f32.mxu0 0.0
    %166 = vmatmul.mubr.f32.gmra.mxu0 %v94
    %v167 = vpop.f32.mrf.mxu0
    %v168 = vadd.f32 0.0, %v167
    %v169 = vpop.f32.mrf.mxu0
    %170 = vdwg.mxu0
    %vm171 = vcmask 15360
    %172 = vst.msk [vmem:[%s5] sm:$0xff] %vm171, %v163
    %173 = vst.msk [vmem:[%s5 + $0x8] sm:$0xff] %vm171, %v168
    %v174 = vld [vmem:[%s3] sm:$0xff]
    %v175 = vld [vmem:[%s3 + $0x8] sm:$0xff]
    %176 = vmatprep.subr.mxu0 0.0
    %177 = vmatpush1.msra.mxu0 0.0
    %178 = vmatprep.subr.mxu0 0.0
    %179 = vmatpush1.msra.mxu0 0.0
    %180 = vmatprep.subr.mxu0 0.0
    %181 = vmatpush1.msra.mxu0 0.0
    %182 = vmatprep.subr.mxu0 0.0
    %183 = vmatpush1.msra.mxu0 0.0
    %184 = vmatprep.subr.mxu0 0.0
    %185 = vmatpush1.msra.mxu0 0.0
    %186 = vmatprep.subr.mxu0 0.0
    %187 = vmatpush1.msra.mxu0 0.0
    %188 = vmatprep.subr.mxu0 0.0
    %189 = vmatpush1.msra.mxu0 0.0
    %190 = vmatprep.subr.mxu0 0.0
    %191 = vmatpush1.msra.mxu0 0.0
    %192 = vmatprep.subr.mxu0 0.0
    %193 = vmatpush1.msra.mxu0 0.0
    %194 = vmatprep.subr.mxu0 0.0
    %195 = vmatpush1.msra.mxu0 0.0
    %196 = vmatprep.subr.mxu0 0.0
    %197 = vmatpush1.msra.mxu0 0.0
    %198 = vmatprep.subr.mxu0 0.0
    %199 = vmatpush1.msra.mxu0 0.0
    %200 = vmatprep.subr.mxu0 0.0
    %201 = vmatpush1.msra.mxu0 0.0
    %202 = vmatprep.subr.mxu0 0.0
    %203 = vmatpush1.msra.mxu0 0.0
    %204 = vmatprep.subr.mxu0 0.0
    %205 = vmatpush1.msra.mxu0 %v175
    %206 = vmatprep.subr.mxu0 0.0
    %207 = vmatpush1.msra.mxu0 %v174
    %208 = vmatprep.subr.mxu0 0.0
    %209 = vmatpush2.msra.mxu0 0.0
    %210 = vmatprep.subr.mxu0 0.0
    %211 = vmatpush2.msra.mxu0 0.0
    %212 = vmatprep.subr.mxu0 0.0
    %213 = vmatpush2.msra.mxu0 0.0
    %214 = vmatprep.subr.mxu0 0.0
    %215 = vmatpush2.msra.mxu0 0.0
    %216 = vmatprep.subr.mxu0 0.0
    %217 = vmatpush2.msra.mxu0 0.0
    %218 = vmatprep.subr.mxu0 0.0
    %219 = vmatpush2.msra.mxu0 0.0
    %220 = vmatprep.subr.mxu0 0.0
    %221 = vmatpush2.msra.mxu0 0.0
    %222 = vmatprep.subr.mxu0 0.0
    %223 = vmatpush2.msra.mxu0 0.0
    %224 = vmatprep.subr.mxu0 0.0
    %225 = vmatpush2.msra.mxu0 0.0
    %226 = vmatprep.subr.mxu0 0.0
    %227 = vmatpush2.msra.mxu0 0.0
    %228 = vmatprep.subr.mxu0 0.0
    %229 = vmatpush2.msra.mxu0 0.0
    %230 = vmatprep.subr.mxu0 0.0
    %231 = vmatpush2.msra.mxu0 0.0
    %232 = vmatprep.subr.mxu0 0.0
    %233 = vmatpush2.msra.mxu0 0.0
    %234 = vmatprep.subr.mxu0 0.0
    %235 = vmatpush2.msra.mxu0 0.0
    %236 = vmatprep.subr.mxu0 0.0
    %237 = vmatpush2.msra.mxu0 0.0
    %238 = vmatprep.subr.mxu0 0.0
    %239 = vmatpush2.msra.mxu0 0.0
    %240 = vmatprep.mubr.f32.mxu0 0.0
    %241 = vmatmul.mubr.f32.gmra.mxu0 %v91
    %v242 = vpop.f32.mrf.mxu0
    %v243 = vadd.f32 0.0, %v242
    %v244 = vpop.f32.mrf.mxu0
    %245 = vmatprep.mubr.f32.mxu0 0.0
    %246 = vmatmul.mubr.f32.gmra.mxu0 %v94
    %v247 = vpop.f32.mrf.mxu0
    %v248 = vadd.f32 0.0, %v247
    %v249 = vpop.f32.mrf.mxu0
    %250 = vdwg.mxu0
    %251 = vst.msk [vmem:[%s6] sm:$0xff] %vm171, %v243
    %252 = vst.msk [vmem:[%s6 + $0x8] sm:$0xff] %vm171, %v248
    // Predicated region
    $region18: #{tpu_custom_call.1} parent=1 // pred_check
      _
    $region19: #{tpu_custom_call.1} parent=1 // pred_check_branch
      %254 = sbr.rel (0) target = $region21
    $region20: #{tpu_custom_call.1} parent=1 // pred_region
      %s256 = ssub.s32 128, 128
      %257 = vsyncadd [#allocation3], %s256
      %s258 = sshll.u32 [#allocation2], 4
      %s259 = int_to_ptr.vmem [resolvable:$true] %s258
      %264 = dma.vmem_to_hbm [thread:$0]  %s259, 128, %s4, [#allocation3], 64, 64, 4
    $region21: #{tpu_custom_call.1} parent=1 // pred_fallthru
      _
    // Predicated region
    $region22: #{tpu_custom_call.1} parent=1 // pred_check
      _
    $region23: #{tpu_custom_call.1} parent=1 // pred_check_branch
      %266 = sbr.rel (0) target = $region25
    $region24: #{tpu_custom_call.1} parent=1 // pred_region
      _
    $region25: #{tpu_custom_call.1} parent=1 // pred_fallthru
      _
    // Predicated region
    $region26: #{tpu_custom_call.1} parent=1 // pred_check
      _
    $region27: #{tpu_custom_call.1} parent=1 // pred_check_branch
      %268 = sbr.rel (0) target = $region29
    $region28: #{tpu_custom_call.1} parent=1 // pred_region
      _
    $region29: #{tpu_custom_call.1} parent=1 // pred_fallthru
      _
    // Predicated region
    $region30: #{tpu_custom_call.1} parent=1 // pred_check
      _
    $region31: #{tpu_custom_call.1} parent=1 // pred_check_branch
      %270 = sbr.rel (0) target = $region33
    $region32: #{tpu_custom_call.1} parent=1 // pred_region
      %271 = dma.done [#allocation3], 128
    $region33: #{tpu_custom_call.1} parent=1 // pred_fallthru
      _
    // Predicated region
    $region34: #{tpu_custom_call.1} parent=1 // pred_check
      _
    $region35: #{tpu_custom_call.1} parent=1 // pred_check_branch
      %273 = sbr.rel (0) target = $region37
    $region36: #{tpu_custom_call.1} parent=1 // pred_region
      _
    $region37: #{tpu_custom_call.1} parent=1 // pred_fallthru
      _
    // Predicated region
    $region38: #{tpu_custom_call.1} parent=1 // pred_check
      _
    $region39: #{tpu_custom_call.1} parent=1 // pred_check_branch
      %275 = sbr.rel (0) target = $region41
    $region40: #{tpu_custom_call.1} parent=1 // pred_region
      _
    $region41: #{tpu_custom_call.1} parent=1 // pred_fallthru
      _
    %276 = vsyncpa [#allocation3], 1

</llo_original>
